<compile_context>
chip_gen: v7x
topology: tpu7x:2x2x1
jax: 0.10.0
libtpu: 0.0.40
codegen_flags: <defaults>
</compile_context>

<pallas_src>
import jax
import jax.numpy as jnp
from jax import lax
from jax.experimental import pallas as pl
from jax.experimental.pallas import tpu as pltpu


def _make_conv_kernel(B, H, W, K, pad, Cin, CinP, side):
    """Build the per-step conv kernel (all shape params are static Python ints)."""
    HW = H * W

    def kernel(x_ref, w_ref, b_ref, o_ref, xbig_ref, patch_ref):
        # x_ref    : (B, Cin, H*W)            block of images, NCHW flattened
        # w_ref    : (Cout, K*K*CinP)         flattened weight (Cin zero-padded to CinP)
        # b_ref    : (Cout, 1)                bias column (zeros if bias=False)
        # o_ref    : (B, Cout, H*W)           conv output, NCHW flattened (lane-dense)
        # xbig_ref : (CinP, side+H*W+side)    zero-margined flat image buffer (scratch)
        # patch_ref: (K*K*CinP, B*H*W)        im2col patch (scratch)

        # Zero ONLY the halo margins and the channel-pad rows (few KiB). The
        # centre rows are fully overwritten per image and the patch is fully
        # overwritten by the tap loop. Done every step (not program_id==0
        # guarded) so it stays correct when the parallel grid axis is sharded
        # across TensorCores.
        if side > 0:
            xbig_ref[:, :side] = jnp.zeros((CinP, side), xbig_ref.dtype)
            xbig_ref[:, side + HW:] = jnp.zeros((CinP, side), xbig_ref.dtype)
        if CinP > Cin:
            xbig_ref[Cin:, side:side + HW] = jnp.zeros((CinP - Cin, HW),
                                                       xbig_ref.dtype)

        # Horizontal validity depends only on w = col % W; vertical out-of-image
        # taps fall into the zero margins of xbig automatically. Hoisted once
        # per step and shared by all B images and all taps with the same dw.
        w_pos = lax.broadcasted_iota(jnp.int32, (CinP, HW), 1) % W
        h_masks = {}
        for dw in range(-pad, pad + 1):
            if dw != 0:
                h_masks[dw] = jnp.logical_and(w_pos + dw >= 0, w_pos + dw < W)

        for b in range(B):
            # Place image b in the centre of the zero-margined flat buffer.
            # `side` is a multiple of 128 -> lane-aligned store.
            xbig_ref[:Cin, side:side + HW] = x_ref[b]
            col0 = b * HW                              # multiple of 128 (HW=256 here)
            for kh in range(K):
                for kw in range(K):
                    dh = kh - pad
                    dw = kw - pad
                    start = side + dh * W + dw
                    shifted = xbig_ref[:, start:start + HW]
                    if dw != 0:
                        shifted = jnp.where(h_masks[dw], shifted, 0.0)
                    row0 = (kh * K + kw) * CinP        # multiple of 8
                    # Full CinP-row block -> unmasked 8-sublane store.
                    patch_ref[row0:row0 + CinP, col0:col0 + HW] = shifted

        # Single fused MXU matmul for the whole block of images:
        #   (Cout, K*K*CinP) @ (K*K*CinP, B*HW) -> (Cout, B*HW)
        acc = jnp.dot(w_ref[...], patch_ref[...],
                      preferred_element_type=jnp.float32)
        acc = acc + b_ref[...]                         # (Cout, 1) broadcast
        for b in range(B):
            # Lane-dense (last dim = H*W) static-slice store per image.
            o_ref[b] = acc[:, b * HW:(b + 1) * HW].astype(o_ref.dtype)

    return kernel


def conv2d_same_nchw_pallas(x_nchw, weight_oihw, bias, kernel_size):
    """Conv2d(in, out, k, padding=k//2, stride=1) on NCHW input via one Pallas kernel.

    Returns the conv output as (N, Cout, H*W), i.e. NCHW memory layout flattened.
    """
    N, Cin, H, W = x_nchw.shape
    Cout = weight_oihw.shape[0]
    K = int(kernel_size)
    # NOTE: PyTorch Conv2d(padding=K//2) with even K gives H+1 outputs per dim;
    # this kernel implements the usual odd-K "same" case.
    assert K % 2 == 1, "kernel_size must be odd for 'same' convolution"
    pad = K // 2
    HW = H * W
    CinP = ((Cin + 7) // 8) * 8                        # 8-aligned patch row blocks
    margin = pad * (W + 1)                             # max |flat index shift|
    side = ((margin + 127) // 128) * 128 if margin > 0 else 0

    # Batch B images per grid step to amortize ~0.35us/step grid overhead and
    # reuse the resident weight over more MXU columns, but keep >= 2 steps
    # whenever N >= 2 so both TensorCores stay busy on megacore parts (v7x).
    num_steps = 2 if N >= 2 else 1
    B = -(-N // num_steps)
    Npad = num_steps * B

    x_flat = x_nchw.reshape(N, Cin, HW)                # NCHW memory is already this: free
    if Npad != N:
        x_flat = jnp.pad(x_flat, ((0, Npad - N), (0, 0), (0, 0)))

    # (Cout, Cin, K, K) -> (Cout, K, K, CinP) -> (Cout, K*K*CinP)   (tiny, done once)
    w = jnp.transpose(weight_oihw, (0, 2, 3, 1))
    if CinP != Cin:
        w = jnp.pad(w, ((0, 0), (0, 0), (0, 0), (0, CinP - Cin)))
    w_flat = w.reshape(Cout, K * K * CinP)
    b_col = bias.reshape(Cout, 1)

    kernel = _make_conv_kernel(B, H, W, K, pad, Cin, CinP, side)

    itemsize = jnp.dtype(x_nchw.dtype).itemsize
    cost = pl.CostEstimate(
        flops=2 * N * Cout * K * K * Cin * HW,
        transcendentals=0,
        bytes_accessed=int((Npad * Cin * HW + Cout * K * K * CinP + Cout
                            + Npad * Cout * HW) * itemsize),
    )

    # NOTE: for large Cin/H*W the im2col scratch (K*K*CinP * B*HW * 4 B) must be
    # tiled over an HW row-block grid axis (or the contraction chunked) to stay
    # inside v7x's 64 MiB VMEM; at these sizes it is ~72 KiB so the default
    # scoped-VMEM limit is ample on every generation.
    out_flat = pl.pallas_call(
        kernel,
        out_shape=jax.ShapeDtypeStruct((Npad, Cout, HW), x_nchw.dtype),
        grid_spec=pltpu.PrefetchScalarGridSpec(
            num_scalar_prefetch=0,
            grid=(num_steps,),
            in_specs=[
                pl.BlockSpec((B, Cin, HW), lambda s: (s, 0, 0)),
                pl.BlockSpec((Cout, K * K * CinP), lambda s: (0, 0)),
                pl.BlockSpec((Cout, 1), lambda s: (0, 0)),
            ],
            out_specs=pl.BlockSpec((B, Cout, HW), lambda s: (s, 0, 0)),
            scratch_shapes=[
                pltpu.VMEM((CinP, side + HW + side), x_nchw.dtype),
                pltpu.VMEM((K * K * CinP, B * HW), x_nchw.dtype),
            ],
        ),
        compiler_params=pltpu.CompilerParams(
            dimension_semantics=("parallel",)),
        cost_estimate=cost,
    )(x_flat, w_flat, b_col)

    if Npad != N:
        out_flat = out_flat[:N]
    return out_flat


def pixel_shuffle_from_flat(y_flat, H, W, r=2):
    """torch.nn.PixelShuffle(r) on a conv output given as (N, C*r*r, H*W) NCHW-flat."""
    N, Crr, _ = y_flat.shape
    C = Crr // (r * r)
    y = y_flat.reshape(N, C, r, r, H, W)
    y = jnp.transpose(y, (0, 1, 4, 2, 5, 3))           # N, C, H, r, W, r
    return y.reshape(N, C, H * r, W * r)


class TailShufflePallas:
    """JAX/Pallas port of Tail_shuffle(in_channels, out_channels, kernel_size, bias)."""

    def __init__(self, in_channels, out_channels, kernel_size, bias, key):
        self.kernel_size = kernel_size
        kw_, kb_ = jax.random.split(key)
        fan_in = in_channels * kernel_size * kernel_size
        bound = 1.0 / float(fan_in) ** 0.5
        # deterministic synthetic init (matches PyTorch conv param shapes)
        self.weight = jax.random.uniform(
            kw_, (out_channels, in_channels, kernel_size, kernel_size),
            minval=-bound, maxval=bound, dtype=jnp.float32)
        if bias:
            self.bias = jax.random.uniform(
                kb_, (out_channels,), minval=-bound, maxval=bound,
                dtype=jnp.float32)
        else:
            self.bias = jnp.zeros((out_channels,), jnp.float32)

    def __call__(self, feat_nchw):
        N, Cin, H, W = feat_nchw.shape
        y_flat = conv2d_same_nchw_pallas(feat_nchw, self.weight, self.bias,
                                         self.kernel_size)
        # TODO(synk): fusing PixelShuffle's stride-2 lane interleave into the
        # kernel's store would need an even/odd lane-expansion swizzle with no
        # clean roll/mask equivalent; left to XLA glue on the small conv output.
        return pixel_shuffle_from_flat(y_flat, H, W, r=2)


if __name__ == "__main__":
    key = jax.random.PRNGKey(0)
    k_x, k_p = jax.random.split(key)

    # Small shapes consistent with the module: out_channels must be a
    # multiple of 4 for PixelShuffle(2).
    N, Cin, H, W = 2, 4, 16, 16
    Cout, K = 16, 3

    x = jax.random.normal(k_x, (N, Cin, H, W), dtype=jnp.float32)
    module = TailShufflePallas(Cin, Cout, K, bias=True, key=k_p)

    out = module(x)
    out = jax.block_until_ready(out)
    assert out.shape == (N, Cout // 4, H * 2, W * 2), out.shape

    # Reference check: XLA conv + pixel shuffle (same math as the PyTorch module).
    ref_conv = jax.lax.conv_general_dilated(
        x, module.weight, window_strides=(1, 1),
        padding=((K // 2, K // 2), (K // 2, K // 2)),
        dimension_numbers=("NCHW", "OIHW", "NCHW"))
    ref_conv = ref_conv + module.bias[None, :, None, None]
    ref = pixel_shuffle_from_flat(ref_conv.reshape(N, Cout, H * W), H, W, r=2)
    err = float(jnp.max(jnp.abs(out - ref)))
    assert jnp.allclose(out, ref, atol=1e-4, rtol=1e-4), err

    print("KERNEL_OK")
</pallas_src>

<mosaic_0001>
module attributes {stable_mosaic.version = 11 : i64} {
  func.func @kernel(%arg0: i32, %arg1: memref<1x4x256xf32, #tpu.memory_space<vmem>>, %arg2: memref<16x72xf32, #tpu.memory_space<vmem>>, %arg3: memref<16x1xf32, #tpu.memory_space<vmem>>, %arg4: memref<1x16x256xf32, #tpu.memory_space<vmem>>, %arg5: memref<8x512xf32, #tpu.memory_space<vmem>>, %arg6: memref<72x256xf32, #tpu.memory_space<vmem>>) attributes {dimension_semantics = [#tpu.dimension_semantics<parallel>], iteration_bounds = array<i64: 2>, scalar_prefetch = 0 : i64, scratch_operands = 2 : i64, tpu.core_type = #tpu.core_type<tc>, window_params = [{transform_indices = @transform_0, window_bounds = array<i64: 1, 4, 256>}, {pipeline_mode = #tpu.pipeline_mode<synchronous>, transform_indices = @transform_1, window_bounds = array<i64: 16, 72>}, {pipeline_mode = #tpu.pipeline_mode<synchronous>, transform_indices = @transform_2, window_bounds = array<i64: 16, 1>}, {transform_indices = @transform_3, window_bounds = array<i64: 1, 16, 256>}]} {
    %cst = arith.constant 0.000000e+00 : f32
    %0 = vector.broadcast %cst : f32 to vector<8x128xf32>
    %c0 = arith.constant 0 : index
    %c0_0 = arith.constant 0 : index
    %1 = vector.load %arg5[%c0, %c0_0] : memref<8x512xf32, #tpu.memory_space<vmem>>, vector<8x128xf32>
    tpu.vector_store %arg5[%c0, %c0_0], %0 {strides = array<i32>} : memref<8x512xf32, #tpu.memory_space<vmem>>, vector<8x128xf32>,
    %cst_1 = arith.constant 0.000000e+00 : f32
    %2 = vector.broadcast %cst_1 : f32 to vector<8x128xf32>
    %c0_2 = arith.constant 0 : index
    %c384 = arith.constant 384 : index
    %3 = vector.load %arg5[%c0_2, %c384] : memref<8x512xf32, #tpu.memory_space<vmem>>, vector<8x128xf32>
    tpu.vector_store %arg5[%c0_2, %c384], %2 {strides = array<i32>} : memref<8x512xf32, #tpu.memory_space<vmem>>, vector<8x128xf32>,
    %cst_3 = arith.constant 0.000000e+00 : f32
    %4 = vector.broadcast %cst_3 : f32 to vector<4x256xf32>
    %c4 = arith.constant 4 : index
    %c128 = arith.constant 128 : index
    %5 = vector.load %arg5[%c4, %c128] : memref<8x512xf32, #tpu.memory_space<vmem>>, vector<4x256xf32>
    tpu.vector_store %arg5[%c4, %c128], %4 {strides = array<i32>} : memref<8x512xf32, #tpu.memory_space<vmem>>, vector<4x256xf32>,
    %6 = tpu.iota {dimensions = array<i32: 1>} : vector<8x256xi32>
    %c16_i32 = arith.constant 16 : i32
    %c0_i32 = arith.constant 0 : i32
    %7 = arith.cmpi eq, %c16_i32, %c0_i32 : i32
    %c1_i32 = arith.constant 1 : i32
    %8 = arith.select %7, %c1_i32, %c16_i32 : i32
    %9 = vector.broadcast %8 : i32 to vector<8x256xi32>
    %10 = arith.remsi %6, %9 : vector<8x256xi32>
    %c0_i32_4 = arith.constant 0 : i32
    %11 = vector.broadcast %c0_i32_4 : i32 to vector<8x256xi32>
    %12 = arith.cmpi ne, %10, %11 : vector<8x256xi32>
    %c0_i32_5 = arith.constant 0 : i32
    %13 = vector.broadcast %c0_i32_5 : i32 to vector<8x256xi32>
    %14 = arith.cmpi slt, %10, %13 : vector<8x256xi32>
    %c0_i32_6 = arith.constant 0 : i32
    %15 = arith.cmpi slt, %8, %c0_i32_6 : i32
    %16 = vector.broadcast %15 : i1 to vector<8x256xi1>
    %17 = vector.broadcast %16 : vector<8x256xi1> to vector<8x256xi1>
    %18 = arith.xori %14, %17 : vector<8x256xi1>
    %19 = arith.andi %18, %12 : vector<8x256xi1>
    %20 = vector.broadcast %8 : i32 to vector<8x256xi32>
    %21 = arith.addi %10, %20 : vector<8x256xi32>
    %22 = arith.select %19, %21, %10 : vector<8x256xi1>, vector<8x256xi32>
    %c-1_i32 = arith.constant -1 : i32
    %23 = vector.broadcast %c-1_i32 : i32 to vector<8x256xi32>
    %24 = arith.addi %22, %23 : vector<8x256xi32>
    %c0_i32_7 = arith.constant 0 : i32
    %25 = vector.broadcast %c0_i32_7 : i32 to vector<8x256xi32>
    %26 = arith.cmpi sge, %24, %25 : vector<8x256xi32>
    %c-1_i32_8 = arith.constant -1 : i32
    %27 = vector.broadcast %c-1_i32_8 : i32 to vector<8x256xi32>
    %28 = arith.addi %22, %27 : vector<8x256xi32>
    %c16_i32_9 = arith.constant 16 : i32
    %29 = vector.broadcast %c16_i32_9 : i32 to vector<8x256xi32>
    %30 = arith.cmpi slt, %28, %29 : vector<8x256xi32>
    %31 = arith.andi %26, %30 : vector<8x256xi1>
    %c1_i32_10 = arith.constant 1 : i32
    %32 = vector.broadcast %c1_i32_10 : i32 to vector<8x256xi32>
    %33 = arith.addi %22, %32 : vector<8x256xi32>
    %c0_i32_11 = arith.constant 0 : i32
    %34 = vector.broadcast %c0_i32_11 : i32 to vector<8x256xi32>
    %35 = arith.cmpi sge, %33, %34 : vector<8x256xi32>
    %c1_i32_12 = arith.constant 1 : i32
    %36 = vector.broadcast %c1_i32_12 : i32 to vector<8x256xi32>
    %37 = arith.addi %22, %36 : vector<8x256xi32>
    %c16_i32_13 = arith.constant 16 : i32
    %38 = vector.broadcast %c16_i32_13 : i32 to vector<8x256xi32>
    %39 = arith.cmpi slt, %37, %38 : vector<8x256xi32>
    %40 = arith.andi %35, %39 : vector<8x256xi1>
    %c0_14 = arith.constant 0 : index
    %c0_15 = arith.constant 0 : index
    %c0_16 = arith.constant 0 : index
    %41 = vector.load %arg1[%c0_14, %c0_15, %c0_16] : memref<1x4x256xf32, #tpu.memory_space<vmem>>, vector<1x4x256xf32>
    %42 = vector.shape_cast %41 : vector<1x4x256xf32> to vector<4x256xf32>
    %c0_17 = arith.constant 0 : index
    %c128_18 = arith.constant 128 : index
    %43 = vector.load %arg5[%c0_17, %c128_18] : memref<8x512xf32, #tpu.memory_space<vmem>>, vector<4x256xf32>
    tpu.vector_store %arg5[%c0_17, %c128_18], %42 {strides = array<i32>} : memref<8x512xf32, #tpu.memory_space<vmem>>, vector<4x256xf32>,
    %c0_19 = arith.constant 0 : index
    %c111 = arith.constant 111 : index
    %44 = vector.load %arg5[%c0_19, %c111] : memref<8x512xf32, #tpu.memory_space<vmem>>, vector<8x256xf32>
    %cst_20 = arith.constant 0.000000e+00 : f32
    %45 = vector.broadcast %cst_20 : f32 to vector<8x256xf32>
    %46 = arith.select %31, %44, %45 : vector<8x256xi1>, vector<8x256xf32>
    %c0_21 = arith.constant 0 : index
    %c0_22 = arith.constant 0 : index
    %47 = vector.load %arg6[%c0_21, %c0_22] : memref<72x256xf32, #tpu.memory_space<vmem>>, vector<8x256xf32>
    tpu.vector_store %arg6[%c0_21, %c0_22], %46 {strides = array<i32>} : memref<72x256xf32, #tpu.memory_space<vmem>>, vector<8x256xf32>,
    %c0_23 = arith.constant 0 : index
    %c112 = arith.constant 112 : index
    %48 = vector.load %arg5[%c0_23, %c112] : memref<8x512xf32, #tpu.memory_space<vmem>>, vector<8x256xf32>
    %c8 = arith.constant 8 : index
    %c0_24 = arith.constant 0 : index
    %49 = vector.load %arg6[%c8, %c0_24] : memref<72x256xf32, #tpu.memory_space<vmem>>, vector<8x256xf32>
    tpu.vector_store %arg6[%c8, %c0_24], %48 {strides = array<i32>} : memref<72x256xf32, #tpu.memory_space<vmem>>, vector<8x256xf32>,
    %c0_25 = arith.constant 0 : index
    %c113 = arith.constant 113 : index
    %50 = vector.load %arg5[%c0_25, %c113] : memref<8x512xf32, #tpu.memory_space<vmem>>, vector<8x256xf32>
    %cst_26 = arith.constant 0.000000e+00 : f32
    %51 = vector.broadcast %cst_26 : f32 to vector<8x256xf32>
    %52 = arith.select %40, %50, %51 : vector<8x256xi1>, vector<8x256xf32>
    %c16 = arith.constant 16 : index
    %c0_27 = arith.constant 0 : index
    %53 = vector.load %arg6[%c16, %c0_27] : memref<72x256xf32, #tpu.memory_space<vmem>>, vector<8x256xf32>
    tpu.vector_store %arg6[%c16, %c0_27], %52 {strides = array<i32>} : memref<72x256xf32, #tpu.memory_space<vmem>>, vector<8x256xf32>,
    %c0_28 = arith.constant 0 : index
    %c127 = arith.constant 127 : index
    %54 = vector.load %arg5[%c0_28, %c127] : memref<8x512xf32, #tpu.memory_space<vmem>>, vector<8x256xf32>
    %cst_29 = arith.constant 0.000000e+00 : f32
    %55 = vector.broadcast %cst_29 : f32 to vector<8x256xf32>
    %56 = arith.select %31, %54, %55 : vector<8x256xi1>, vector<8x256xf32>
    %c24 = arith.constant 24 : index
    %c0_30 = arith.constant 0 : index
    %57 = vector.load %arg6[%c24, %c0_30] : memref<72x256xf32, #tpu.memory_space<vmem>>, vector<8x256xf32>
    tpu.vector_store %arg6[%c24, %c0_30], %56 {strides = array<i32>} : memref<72x256xf32, #tpu.memory_space<vmem>>, vector<8x256xf32>,
    %c0_31 = arith.constant 0 : index
    %c128_32 = arith.constant 128 : index
    %58 = vector.load %arg5[%c0_31, %c128_32] : memref<8x512xf32, #tpu.memory_space<vmem>>, vector<8x256xf32>
    %c32 = arith.constant 32 : index
    %c0_33 = arith.constant 0 : index
    %59 = vector.load %arg6[%c32, %c0_33] : memref<72x256xf32, #tpu.memory_space<vmem>>, vector<8x256xf32>
    tpu.vector_store %arg6[%c32, %c0_33], %58 {strides = array<i32>} : memref<72x256xf32, #tpu.memory_space<vmem>>, vector<8x256xf32>,
    %c0_34 = arith.constant 0 : index
    %c129 = arith.constant 129 : index
    %60 = vector.load %arg5[%c0_34, %c129] : memref<8x512xf32, #tpu.memory_space<vmem>>, vector<8x256xf32>
    %cst_35 = arith.constant 0.000000e+00 : f32
    %61 = vector.broadcast %cst_35 : f32 to vector<8x256xf32>
    %62 = arith.select %40, %60, %61 : vector<8x256xi1>, vector<8x256xf32>
    %c40 = arith.constant 40 : index
    %c0_36 = arith.constant 0 : index
    %63 = vector.load %arg6[%c40, %c0_36] : memref<72x256xf32, #tpu.memory_space<vmem>>, vector<8x256xf32>
    tpu.vector_store %arg6[%c40, %c0_36], %62 {strides = array<i32>} : memref<72x256xf32, #tpu.memory_space<vmem>>, vector<8x256xf32>,
    %c0_37 = arith.constant 0 : index
    %c143 = arith.constant 143 : index
    %64 = vector.load %arg5[%c0_37, %c143] : memref<8x512xf32, #tpu.memory_space<vmem>>, vector<8x256xf32>
    %cst_38 = arith.constant 0.000000e+00 : f32
    %65 = vector.broadcast %cst_38 : f32 to vector<8x256xf32>
    %66 = arith.select %31, %64, %65 : vector<8x256xi1>, vector<8x256xf32>
    %c48 = arith.constant 48 : index
    %c0_39 = arith.constant 0 : index
    %67 = vector.load %arg6[%c48, %c0_39] : memref<72x256xf32, #tpu.memory_space<vmem>>, vector<8x256xf32>
    tpu.vector_store %arg6[%c48, %c0_39], %66 {strides = array<i32>} : memref<72x256xf32, #tpu.memory_space<vmem>>, vector<8x256xf32>,
    %c0_40 = arith.constant 0 : index
    %c144 = arith.constant 144 : index
    %68 = vector.load %arg5[%c0_40, %c144] : memref<8x512xf32, #tpu.memory_space<vmem>>, vector<8x256xf32>
    %c56 = arith.constant 56 : index
    %c0_41 = arith.constant 0 : index
    %69 = vector.load %arg6[%c56, %c0_41] : memref<72x256xf32, #tpu.memory_space<vmem>>, vector<8x256xf32>
    tpu.vector_store %arg6[%c56, %c0_41], %68 {strides = array<i32>} : memref<72x256xf32, #tpu.memory_space<vmem>>, vector<8x256xf32>,
    %c0_42 = arith.constant 0 : index
    %c145 = arith.constant 145 : index
    %70 = vector.load %arg5[%c0_42, %c145] : memref<8x512xf32, #tpu.memory_space<vmem>>, vector<8x256xf32>
    %cst_43 = arith.constant 0.000000e+00 : f32
    %71 = vector.broadcast %cst_43 : f32 to vector<8x256xf32>
    %72 = arith.select %40, %70, %71 : vector<8x256xi1>, vector<8x256xf32>
    %c64 = arith.constant 64 : index
    %c0_44 = arith.constant 0 : index
    %73 = vector.load %arg6[%c64, %c0_44] : memref<72x256xf32, #tpu.memory_space<vmem>>, vector<8x256xf32>
    tpu.vector_store %arg6[%c64, %c0_44], %72 {strides = array<i32>} : memref<72x256xf32, #tpu.memory_space<vmem>>, vector<8x256xf32>,
    %c0_45 = arith.constant 0 : index
    %c0_46 = arith.constant 0 : index
    %74 = vector.load %arg2[%c0_45, %c0_46] : memref<16x72xf32, #tpu.memory_space<vmem>>, vector<16x72xf32>
    %c0_47 = arith.constant 0 : index
    %c0_48 = arith.constant 0 : index
    %75 = vector.load %arg6[%c0_47, %c0_48] : memref<72x256xf32, #tpu.memory_space<vmem>>, vector<72x256xf32>
    %cst_49 = arith.constant dense<0.000000e+00> : vector<16x256xf32>
    %76 = tpu.matmul %74, %75, %cst_49 {dimension_numbers = #tpu.dot_dimension_numbers<[1], [0], [0], [1], [0, 0, 1, 1], [], []>} : vector<16x72xf32>, vector<72x256xf32>, vector<16x256xf32> -> vector<16x256xf32>
    %c0_50 = arith.constant 0 : index
    %c0_51 = arith.constant 0 : index
    %77 = vector.load %arg3[%c0_50, %c0_51] : memref<16x1xf32, #tpu.memory_space<vmem>>, vector<16x1xf32>
    %78 = vector.broadcast %77 : vector<16x1xf32> to vector<16x256xf32>
    %79 = arith.addf %76, %78 : vector<16x256xf32>
    %c0_52 = arith.constant 0 : index
    %c0_53 = arith.constant 0 : index
    %c0_54 = arith.constant 0 : index
    %80 = vector.load %arg4[%c0_52, %c0_53, %c0_54] : memref<1x16x256xf32, #tpu.memory_space<vmem>>, vector<1x16x256xf32>
    %81 = vector.shape_cast %80 : vector<1x16x256xf32> to vector<16x256xf32>
    %82 = vector.shape_cast %79 : vector<16x256xf32> to vector<1x16x256xf32>
    tpu.vector_store %arg4[%c0_52, %c0_53, %c0_54], %82 {strides = array<i32>} : memref<1x16x256xf32, #tpu.memory_space<vmem>>, vector<1x16x256xf32>,
    return
  }
  func.func @transform_0(%arg0: i32) -> (i32, i32, i32) {
    %c0_i32 = arith.constant 0 : i32
    %c0_i32_0 = arith.constant 0 : i32
    %c0_i32_1 = arith.constant 0 : i32
    return %arg0, %c0_i32, %c0_i32_0 : i32, i32, i32
  }
  func.func @transform_1(%arg0: i32) -> (i32, i32) {
    %c0_i32 = arith.constant 0 : i32
    %c0_i32_0 = arith.constant 0 : i32
    %c0_i32_1 = arith.constant 0 : i32
    return %c0_i32, %c0_i32_0 : i32, i32
  }
  func.func @transform_2(%arg0: i32) -> (i32, i32) {
    %c0_i32 = arith.constant 0 : i32
    %c0_i32_0 = arith.constant 0 : i32
    %c0_i32_1 = arith.constant 0 : i32
    return %c0_i32, %c0_i32_0 : i32, i32
  }
  func.func @transform_3(%arg0: i32) -> (i32, i32, i32) {
    %c0_i32 = arith.constant 0 : i32
    %c0_i32_0 = arith.constant 0 : i32
    %c0_i32_1 = arith.constant 0 : i32
    return %arg0, %c0_i32, %c0_i32_0 : i32, i32, i32
  }
}

</mosaic_0001>

<llo_original>
// kernel: tpu_custom_call.1
$region0: #{tpu_custom_call.1}
  #allocation0 [shape = 'u32[]', space=smem, size = 0x4, offset = 0x4, fixed_abs, tag = 'smem constant byte address 0x4 - core index']
  #allocation1 [shape = 'u32[144,128]{1,0:T(1,128)}', space=vmem, size = 0x12000, scoped, tag = 'internal scratch']
  #allocation2 [shape = 'f32[8,512]{1,0:T(8,128)}', space=vmem, size = 0x4000, scoped, tag = 'scratch operand']
  #allocation3 [shape = 'f32[72,256]{1,0:T(8,128)}', space=vmem, size = 0x12000, scoped, tag = 'scratch operand']
  %s0 = inlined_call_operand.vmem [shape: f32[2,4,256], index: 0, kind: input, shape index: {}]
  %s1 = inlined_call_operand.hbm [shape: f32[16,72], index: 1, kind: input, shape index: {}]
  %s2 = inlined_call_operand.vmem [shape: f32[16,1], index: 2, kind: input, shape index: {}]
  %s3 = inlined_call_operand.hbm [shape: f32[2,16,256], index: 3, kind: output, shape index: {}]
  %s4 = sld [smem:[#allocation0]]
  $region49: #{tpu_custom_call.1} parent=0
    _
  %s6 = ssub.s32 1, %s4
  %s7 = scalar_select 0, %s6, %s4
  $region1: #{tpu_custom_call.1} parent=0
    #allocation4 [shape = 'u8[8192]{0}', space=vmem, size = 0x2000, scoped, tag = 'input window, operand 1, single buffered']
    #allocation5 [shape = 's32[2]{0}', space=sflag, size = 0x8, scoped, tag = 'scoped memory for tpu_custom_call.1']
    #allocation6 [shape = 's32[2]{0}', space=sflag, size = 0x8, scoped, tag = 'scoped memory for tpu_custom_call.1']
    #allocation7 [shape = 'u8[32768]{0}', space=vmem, size = 0x8000, scoped, tag = 'output window, operand 0']
    %8 = vsyncpa [#allocation5], 0
    %9 = vsyncpa [#allocation6], 0
    %s10 = scalar_lea.sflag [#allocation6], 1
    %11 = vsyncpa %s10, 0
    loop: start=0, step=1, limit=4
    $region2: #{tpu_custom_call.1} parent=1 // loop_pre_header
      _
    $region3: #{tpu_custom_call.1} parent=1 // loop_header
      %s13 = sphi 0, %s17
      %p14 = scmp.ge.s32.totalorder %s13, 4
      %s23 = sphi 0, %s25
      %s26 = sphi 0, %s23
      %s27 = sphi 0, %s26
      %s43 = sphi 0, %s27
      %s47 = sphi 0, %s47
      %s49 = sphi 0, %s47
      %s50 = sphi 0, %s49
      %s64 = sphi 0, %s50
      %s68 = sphi 0, %s68
      %s70 = sphi 0, %s68
      %s71 = sphi 0, %s70
      %s85 = sphi 0, %s71
      %s91 = sphi 0, %s93
      %s94 = sphi 0, %s91
      %s95 = sphi 0, %s94
      %s111 = sphi 0, %s95
    $region4: #{tpu_custom_call.1} parent=1 // loop_header_branch
      %16 = sbr.rel (%p14) target = $region8
    $region5: #{tpu_custom_call.1} parent=1 // loop_body
      %s18 = ssub.s32 %s13, 1
      %s19 = ssub.s32 %s13, 2
      %s20 = sadd.s32 %s13, 1
      %s21 = ssub.s32 %s13, %s20
      %p22 = scmp.eq.s32.totalorder %s21, 0
      %s24 = sadd.s32 %s23, 1
      %s25 = scalar_select %p22, %s23, %s24
      %p28 = pneg %p22
      %p29 = scmp.eq.s32.totalorder %s13, 1
      %p30 = por %p28, %p29
      %p31 = scmp.ne.s32.totalorder %s23, %s26
      %p32 = scmp.eq.s32.totalorder %s13, 0
      %p33 = por %p31, %p32
      %p34 = scmp.ne.s32.totalorder %s23, %s26
      %p35 = scmp.eq.s32.totalorder %s18, 1
      %p36 = por %p34, %p35
      %p37 = scmp.ne.s32.totalorder %s26, %s27
      %p38 = scmp.eq.s32.totalorder %s18, 0
      %p39 = por %p37, %p38
      %p40 = scmp.ne.s32.totalorder %s26, %s27
      %p41 = scmp.eq.s32.totalorder %s19, 1
      %p42 = por %p40, %p41
      %p44 = scmp.ne.s32.totalorder %s27, %s43
      %p45 = scmp.eq.s32.totalorder %s19, 0
      %p46 = por %p44, %p45
      %s48 = sadd.s32 %s47, 1
      %p51 = scmp.eq.s32.totalorder %s13, 1
      %p52 = scmp.ne.s32.totalorder %s47, %s49
      %p53 = scmp.eq.s32.totalorder %s13, 0
      %p54 = por %p52, %p53
      %p55 = scmp.ne.s32.totalorder %s47, %s49
      %p56 = scmp.eq.s32.totalorder %s18, 1
      %p57 = por %p55, %p56
      %p58 = scmp.ne.s32.totalorder %s49, %s50
      %p59 = scmp.eq.s32.totalorder %s18, 0
      %p60 = por %p58, %p59
      %p61 = scmp.ne.s32.totalorder %s49, %s50
      %p62 = scmp.eq.s32.totalorder %s19, 1
      %p63 = por %p61, %p62
      %p65 = scmp.ne.s32.totalorder %s50, %s64
      %p66 = scmp.eq.s32.totalorder %s19, 0
      %p67 = por %p65, %p66
      %s69 = sadd.s32 %s68, 1
      %p72 = scmp.eq.s32.totalorder %s13, 1
      %p73 = scmp.ne.s32.totalorder %s68, %s70
      %p74 = scmp.eq.s32.totalorder %s13, 0
      %p75 = por %p73, %p74
      %p76 = scmp.ne.s32.totalorder %s68, %s70
      %p77 = scmp.eq.s32.totalorder %s18, 1
      %p78 = por %p76, %p77
      %p79 = scmp.ne.s32.totalorder %s70, %s71
      %p80 = scmp.eq.s32.totalorder %s18, 0
      %p81 = por %p79, %p80
      %p82 = scmp.ne.s32.totalorder %s70, %s71
      %p83 = scmp.eq.s32.totalorder %s19, 1
      %p84 = por %p82, %p83
      %p86 = scmp.ne.s32.totalorder %s71, %s85
      %p87 = scmp.eq.s32.totalorder %s19, 0
      %p88 = por %p86, %p87
      %s89 = ssub.s32 %s13, %s20
      %p90 = scmp.eq.s32.totalorder %s89, 0
      %s92 = sadd.s32 %s91, 1
      %s93 = scalar_select %p90, %s91, %s92
      %p96 = pneg %p90
      %p97 = scmp.eq.s32.totalorder %s13, 1
      %p98 = por %p96, %p97
      %p99 = scmp.ne.s32.totalorder %s91, %s94
      %p100 = scmp.eq.s32.totalorder %s13, 0
      %p101 = por %p99, %p100
      %p102 = scmp.ne.s32.totalorder %s91, %s94
      %p103 = scmp.eq.s32.totalorder %s18, 1
      %p104 = por %p102, %p103
      %p105 = scmp.ne.s32.totalorder %s94, %s95
      %p106 = scmp.eq.s32.totalorder %s18, 0
      %p107 = por %p105, %p106
      %p108 = scmp.ne.s32.totalorder %s94, %s95
      %p109 = scmp.eq.s32.totalorder %s19, 1
      %p110 = por %p108, %p109
      %p112 = scmp.ne.s32.totalorder %s95, %s111
      %p113 = scmp.eq.s32.totalorder %s19, 0
      %p114 = por %p112, %p113
      %p115 = scmp.le.s32.totalorder 1, %s13
      %p116 = scmp.lt.s32.totalorder %s13, 3
      %p117 = pnand %p115, %p116
      %p118 = pneg %p117
      // Predicated region
      $region9: #{tpu_custom_call.1} parent=5 // pred_check
        _
      $region10: #{tpu_custom_call.1} parent=5 // pred_check_branch
        %120 = sbr.rel (%p117) target = $region12
      $region11: #{tpu_custom_call.1} parent=5 // pred_region
        %s121 = ssub.s32 %s13, 1
        // Predicated region
        $region13: #{tpu_custom_call.1} parent=11 // pred_check
          %p122 = pneg %p60
        $region14: #{tpu_custom_call.1} parent=11 // pred_check_branch
          %124 = sbr.rel (%p122) target = $region16
        $region15: #{tpu_custom_call.1} parent=11 // pred_region
          %s126 = ssub.s32 256, 256
          %127 = vsyncadd [#allocation5], %s126
          %s128 = sshll.u32 [#allocation4], 4
          %s129 = int_to_ptr.vmem [resolvable:$true] %s128
          %134 = dma.hbm_to_vmem [thread:$0]  %s1, 256, %s129, [#allocation5], 128, 128, 8
        $region16: #{tpu_custom_call.1} parent=11 // pred_fallthru
          _
        // Predicated region
        $region17: #{tpu_custom_call.1} parent=11 // pred_check
          %p135 = pneg %p81
        $region18: #{tpu_custom_call.1} parent=11 // pred_check_branch
          %137 = sbr.rel (%p135) target = $region20
        $region19: #{tpu_custom_call.1} parent=11 // pred_region
          _
        $region20: #{tpu_custom_call.1} parent=11 // pred_fallthru
          _
      $region12: #{tpu_custom_call.1} parent=5 // pred_fallthru
        _
      %p138 = scmp.lt.s32.totalorder %s13, 2
      // Predicated region
      $region21: #{tpu_custom_call.1} parent=5 // pred_check
        %p139 = pneg %p138
      $region22: #{tpu_custom_call.1} parent=5 // pred_check_branch
        %141 = sbr.rel (%p139) target = $region24
      $region23: #{tpu_custom_call.1} parent=5 // pred_region
        // Predicated region
        $region25: #{tpu_custom_call.1} parent=23 // pred_check
          %p142 = pneg %p33
        $region26: #{tpu_custom_call.1} parent=23 // pred_check_branch
          %144 = sbr.rel (%p142) target = $region28
        $region27: #{tpu_custom_call.1} parent=23 // pred_region
          %p145 = scmp.lt.s32.totalorder %s13, 1
          %s146 = scalar_select %p145, %s13, 1
          %s147 = smul.addr %s146, 2
          %s148 = smul.addr %s147, 4
          %s149 = scalar_lea.vmem %s0, %s148
        $region28: #{tpu_custom_call.1} parent=23 // pred_fallthru
          _
      $region24: #{tpu_custom_call.1} parent=5 // pred_fallthru
        _
      %p150 = scmp.le.s32.totalorder 1, %s13
      %p151 = scmp.lt.s32.totalorder %s13, 3
      %p152 = pnand %p150, %p151
      %p153 = pneg %p152
      // Predicated region
      $region29: #{tpu_custom_call.1} parent=5 // pred_check
        _
      $region30: #{tpu_custom_call.1} parent=5 // pred_check_branch
        %155 = sbr.rel (%p152) target = $region32
      $region31: #{tpu_custom_call.1} parent=5 // pred_region
        %s156 = ssub.s32 %s13, 1
        // Predicated region
        $region33: #{tpu_custom_call.1} parent=31 // pred_check
          %p157 = pneg %p60
        $region34: #{tpu_custom_call.1} parent=31 // pred_check_branch
          %159 = sbr.rel (%p157) target = $region36
        $region35: #{tpu_custom_call.1} parent=31 // pred_region
          %160 = dma.done [#allocation5], 256
        $region36: #{tpu_custom_call.1} parent=31 // pred_fallthru
          _
        %p161 = scmp.lt.s32.totalorder %s18, 1
        %s162 = scalar_select %p161, %s18, 1
        %s163 = smul.addr %s162, 2
        %s164 = smul.addr %s163, 4
        %s165 = scalar_lea.vmem %s0, %s164
        %p166 = pneg %p39
        %p167 = pneg %p36
        %p168 = pneg %p60
        %p169 = pneg %p57
        %p170 = pneg %p81
        %p171 = pneg %p78
        %p172 = pneg %p107
        %p173 = pneg %p104
        %s174 = sand.u32 %s94, 1
        %s175 = scalar_lea.sflag [#allocation6], %s174
        %s176 = sand.u32 %s94, 1
        %s177 = smul.addr %s176, 32
        %s178 = scalar_lea.vmem [#allocation7], %s177
        %p179 = scmp.lt.s32.totalorder %s18, 1
        %s180 = scalar_select %p179, %s18, 1
        %s181 = smul.addr %s180, 2
        %s182 = smul.addr %s181, 4
        %s183 = scalar_lea.vmem %s0, %s182
        %184 = vst [vmem:[#allocation2] sm:$0xff] 0.0
        %185 = vst [vmem:[#allocation2 + $0x18] sm:$0xff] 0.0
        %186 = vst [vmem:[#allocation2 + $0x8] sm:$0xf0] 0.0
        %187 = vst [vmem:[#allocation2 + $0x10] sm:$0xf0] 0.0
        %v188 = vlaneseq
        %v189 = vand.u32 %v188, 127
        %v190 = vadd.s32 %v189, 128
        %vm191 = vcmp.lt.s32.totalorder %v189, 0
        %v192 = vsub.s32 0, %v189
        %v193 = vsel %vm191, %v192, %v189
        %v194 = vshrl.u32 %v193, 4
        %v195 = vand.u32 %v193, 15
        %v196 = vsub.s32 0, %v195
        %v197 = vsel %vm191, %v196, %v195
        %vm198 = vcmp.lt.s32.totalorder %v190, 0
        %v199 = vsub.s32 0, %v190
        %v200 = vsel %vm198, %v199, %v190
        %v201 = vshrl.u32 %v200, 4
        %v202 = vand.u32 %v200, 15
        %v203 = vsub.s32 0, %v202
        %v204 = vsel %vm198, %v203, %v202
        %vm205 = vcmp.ne.s32.totalorder %v197, 0
        %vm206 = vcmp.ne.s32.totalorder %v204, 0
        %vm207 = vcmp.lt.s32.totalorder %v197, 0
        %vm208 = vcmp.lt.s32.totalorder %v204, 0
        %vm209 = vmand %vm207, %vm205
        %vm210 = vmand %vm208, %vm206
        %v211 = vadd.s32 %v197, 16
        %v212 = vadd.s32 %v204, 16
        %v213 = vsel %vm209, %v211, %v197
        %v214 = vsel %vm210, %v212, %v204
        %v215 = vadd.s32 %v213, 4294967295
        %v216 = vadd.s32 %v214, 4294967295
        %vm217 = vcmp.ge.s32.totalorder %v215, 0
        %vm218 = vcmp.ge.s32.totalorder %v216, 0
        %vm219 = vcmp.lt.s32.totalorder %v215, 16
        %vm220 = vcmp.lt.s32.totalorder %v216, 16
        %vm221 = vmand %vm217, %vm219
        %vm222 = vmand %vm218, %vm220
        %v223 = vadd.s32 %v213, 1
        %v224 = vadd.s32 %v214, 1
        %vm225 = vcmp.ge.s32.totalorder %v223, 0
        %vm226 = vcmp.ge.s32.totalorder %v224, 0
        %vm227 = vcmp.lt.s32.totalorder %v223, 16
        %vm228 = vcmp.lt.s32.totalorder %v224, 16
        %vm229 = vmand %vm225, %vm227
        %vm230 = vmand %vm226, %vm228
        %v231 = vld [vmem:[%s183] sm:$0xff]
        %v233 = vcombine.high %v231, %v231
        %235 = vst [vmem:[#allocation2 + $0x8] sm:$0xf] %v231
        %236 = vst [vmem:[#allocation2 + $0x10] sm:$0xf] %v233
        %v237 = vld [vmem:[#allocation2] sm:$0xff]
        %v238 = vld [vmem:[#allocation2 + $0x8] sm:$0xff]
        %v239 = vld [vmem:[#allocation2 + $0x10] sm:$0xff]
        %243 = vrot.lane.b32.xlu0 %v237, 17
        %v244 = vpop.permute.xlu0 %243
        %245 = vrot.lane.b32.xlu0 %v238, 17
        %v246 = vpop.permute.xlu0 %245
        %247 = vrot.lane.b32.xlu0 %v239, 17
        %v248 = vpop.permute.xlu0 %247
        %vm249 = vcmask 138240
        %v250 = vsel %vm249, %v244, %v246
        %v251 = vsel %vm249, %v246, %v248
        %v254 = vsel %vm221, %v250, 0.0
        %v255 = vsel %vm222, %v251, 0.0
        %256 = vst [vmem:[#allocation3] sm:$0xff] %v254
        %257 = vst [vmem:[#allocation3 + $0x8] sm:$0xff] %v255
        %v258 = vld [vmem:[#allocation2] sm:$0xff]
        %v259 = vld [vmem:[#allocation2 + $0x8] sm:$0xff]
        %v260 = vld [vmem:[#allocation2 + $0x10] sm:$0xff]
        %264 = vrot.lane.b32.xlu0 %v258, 16
        %v265 = vpop.permute.xlu0 %264
        %266 = vrot.lane.b32.xlu0 %v259, 16
        %v267 = vpop.permute.xlu0 %266
        %268 = vrot.lane.b32.xlu0 %v260, 16
        %v269 = vpop.permute.xlu0 %268
        %vm270 = vcmask 130048
        %v271 = vsel %vm270, %v265, %v267
        %v272 = vsel %vm270, %v267, %v269
        %275 = vst [vmem:[#allocation3 + $0x10] sm:$0xff] %v271
        %276 = vst [vmem:[#allocation3 + $0x18] sm:$0xff] %v272
        %v277 = vld [vmem:[#allocation2] sm:$0xff]
        %v278 = vld [vmem:[#allocation2 + $0x8] sm:$0xff]
        %v279 = vld [vmem:[#allocation2 + $0x10] sm:$0xff]
        %283 = vrot.lane.b32.xlu0 %v277, 15
        %v284 = vpop.permute.xlu0 %283
        %285 = vrot.lane.b32.xlu0 %v278, 15
        %v286 = vpop.permute.xlu0 %285
        %287 = vrot.lane.b32.xlu0 %v279, 15
        %v288 = vpop.permute.xlu0 %287
        %vm289 = vcmask 121856
        %v290 = vsel %vm289, %v284, %v286
        %v291 = vsel %vm289, %v286, %v288
        %v294 = vsel %vm229, %v290, 0.0
        %v295 = vsel %vm230, %v291, 0.0
        %296 = vst [vmem:[#allocation3 + $0x20] sm:$0xff] %v294
        %297 = vst [vmem:[#allocation3 + $0x28] sm:$0xff] %v295
        %v298 = vld [vmem:[#allocation2] sm:$0xff]
        %v299 = vld [vmem:[#allocation2 + $0x8] sm:$0xff]
        %v300 = vld [vmem:[#allocation2 + $0x10] sm:$0xff]
        %304 = vrot.lane.b32.xlu0 %v298, 1
        %v305 = vpop.permute.xlu0 %304
        %306 = vrot.lane.b32.xlu0 %v299, 1
        %v307 = vpop.permute.xlu0 %306
        %308 = vrot.lane.b32.xlu0 %v300, 1
        %v309 = vpop.permute.xlu0 %308
        %vm310 = vcmask 7168
        %v311 = vsel %vm310, %v305, %v307
        %v312 = vsel %vm310, %v307, %v309
        %v315 = vsel %vm221, %v311, 0.0
        %v316 = vsel %vm222, %v312, 0.0
        %317 = vst [vmem:[#allocation3 + $0x30] sm:$0xff] %v315
        %318 = vst [vmem:[#allocation3 + $0x38] sm:$0xff] %v316
        %v319 = vld [vmem:[#allocation2 + $0x8] sm:$0xff]
        %v320 = vld [vmem:[#allocation2 + $0x10] sm:$0xff]
        %321 = vst [vmem:[#allocation3 + $0x40] sm:$0xff] %v319
        %322 = vst [vmem:[#allocation3 + $0x48] sm:$0xff] %v320
        %v323 = vld [vmem:[#allocation2 + $0x8] sm:$0xff]
        %v324 = vld [vmem:[#allocation2 + $0x10] sm:$0xff]
        %v325 = vld [vmem:[#allocation2 + $0x18] sm:$0xff]
        %329 = vrot.lane.b32.xlu0 %v323, 127
        %v330 = vpop.permute.xlu0 %329
        %331 = vrot.lane.b32.xlu0 %v324, 127
        %v332 = vpop.permute.xlu0 %331
        %333 = vrot.lane.b32.xlu0 %v325, 127
        %v334 = vpop.permute.xlu0 %333
        %vm335 = vcmask 1039360
        %v336 = vsel %vm335, %v330, %v332
        %v337 = vsel %vm335, %v332, %v334
        %v340 = vsel %vm229, %v336, 0.0
        %v341 = vsel %vm230, %v337, 0.0
        %342 = vst [vmem:[#allocation3 + $0x50] sm:$0xff] %v340
        %343 = vst [vmem:[#allocation3 + $0x58] sm:$0xff] %v341
        %v344 = vld [vmem:[#allocation2 + $0x8] sm:$0xff]
        %v345 = vld [vmem:[#allocation2 + $0x10] sm:$0xff]
        %v346 = vld [vmem:[#allocation2 + $0x18] sm:$0xff]
        %350 = vrot.lane.b32.xlu0 %v344, 113
        %v351 = vpop.permute.xlu0 %350
        %352 = vrot.lane.b32.xlu0 %v345, 113
        %v353 = vpop.permute.xlu0 %352
        %354 = vrot.lane.b32.xlu0 %v346, 113
        %v355 = vpop.permute.xlu0 %354
        %vm356 = vcmask 924672
        %v357 = vsel %vm356, %v351, %v353
        %v358 = vsel %vm356, %v353, %v355
        %v361 = vsel %vm221, %v357, 0.0
        %v362 = vsel %vm222, %v358, 0.0
        %363 = vst [vmem:[#allocation3 + $0x60] sm:$0xff] %v361
        %364 = vst [vmem:[#allocation3 + $0x68] sm:$0xff] %v362
        %v365 = vld [vmem:[#allocation2 + $0x8] sm:$0xff]
        %v366 = vld [vmem:[#allocation2 + $0x10] sm:$0xff]
        %v367 = vld [vmem:[#allocation2 + $0x18] sm:$0xff]
        %371 = vrot.lane.b32.xlu0 %v365, 112
        %v372 = vpop.permute.xlu0 %371
        %373 = vrot.lane.b32.xlu0 %v366, 112
        %v374 = vpop.permute.xlu0 %373
        %375 = vrot.lane.b32.xlu0 %v367, 112
        %v376 = vpop.permute.xlu0 %375
        %vm377 = vcmask 916480
        %v378 = vsel %vm377, %v372, %v374
        %v379 = vsel %vm377, %v374, %v376
        %382 = vst [vmem:[#allocation3 + $0x70] sm:$0xff] %v378
        %383 = vst [vmem:[#allocation3 + $0x78] sm:$0xff] %v379
        %v384 = vld [vmem:[#allocation2 + $0x8] sm:$0xff]
        %v385 = vld [vmem:[#allocation2 + $0x10] sm:$0xff]
        %v386 = vld [vmem:[#allocation2 + $0x18] sm:$0xff]
        %390 = vrot.lane.b32.xlu0 %v384, 111
        %v391 = vpop.permute.xlu0 %390
        %392 = vrot.lane.b32.xlu0 %v385, 111
        %v393 = vpop.permute.xlu0 %392
        %394 = vrot.lane.b32.xlu0 %v386, 111
        %v395 = vpop.permute.xlu0 %394
        %vm396 = vcmask 908288
        %v397 = vsel %vm396, %v391, %v393
        %v398 = vsel %vm396, %v393, %v395
        %v401 = vsel %vm229, %v397, 0.0
        %v402 = vsel %vm230, %v398, 0.0
        %403 = vst [vmem:[#allocation3 + $0x80] sm:$0xff] %v401
        %404 = vst [vmem:[#allocation3 + $0x88] sm:$0xff] %v402
        %v405 = vld [vmem:[#allocation4] sm:$0xff]
        %v406 = vld [vmem:[#allocation4 + $0x8] sm:$0xff]
        %v407 = vld [vmem:[#allocation3] sm:$0xff]
        %v408 = vld [vmem:[#allocation3 + $0x8] sm:$0xff]
        %v409 = vld [vmem:[#allocation3 + $0x10] sm:$0xff]
        %v410 = vld [vmem:[#allocation3 + $0x18] sm:$0xff]
        %v411 = vld [vmem:[#allocation3 + $0x20] sm:$0xff]
        %v412 = vld [vmem:[#allocation3 + $0x28] sm:$0xff]
        %v413 = vld [vmem:[#allocation3 + $0x30] sm:$0xff]
        %v414 = vld [vmem:[#allocation3 + $0x38] sm:$0xff]
        %v415 = vld [vmem:[#allocation3 + $0x40] sm:$0xff]
        %v416 = vld [vmem:[#allocation3 + $0x48] sm:$0xff]
        %v417 = vld [vmem:[#allocation3 + $0x50] sm:$0xff]
        %v418 = vld [vmem:[#allocation3 + $0x58] sm:$0xff]
        %v419 = vld [vmem:[#allocation3 + $0x60] sm:$0xff]
        %v420 = vld [vmem:[#allocation3 + $0x68] sm:$0xff]
        %v421 = vld [vmem:[#allocation3 + $0x70] sm:$0xff]
        %v422 = vld [vmem:[#allocation3 + $0x78] sm:$0xff]
        %v423 = vld [vmem:[#allocation3 + $0x80] sm:$0xff]
        %v424 = vld [vmem:[#allocation3 + $0x88] sm:$0xff]
        %v425 = vld [vmem:[%s2] sm:$0xff]
        %v426 = vld [vmem:[%s2 + $0x8] sm:$0xff]
        %428 = vset.pattern.permute.xlu0 0
        %429 = vperm.xlu0 %428, %v425
        %v430 = vpop.permute.xlu0 %429
        %433 = vset.pattern.permute.xlu0 0
        %434 = vperm.xlu0 %433, %v426
        %v435 = vpop.permute.xlu0 %434
        %vm437 = vcmask 588800
        %v439 = vsel %vm437, %v405, 0
        %v442 = vsel %vm437, %v406, 0
        %444 = vmatprep.subr.mxu0 %v408
        %445 = vmatpush1.msra.mxu0 %v407
        %446 = vmatprep.subr.mxu0 %v410
        %447 = vmatpush1.msra.mxu0 %v409
        %448 = vmatprep.subr.mxu0 %v412
        %449 = vmatpush1.msra.mxu0 %v411
        %450 = vmatprep.subr.mxu0 %v414
        %451 = vmatpush1.msra.mxu0 %v413
        %452 = vmatprep.subr.mxu0 %v416
        %453 = vmatpush1.msra.mxu0 %v415
        %454 = vmatprep.subr.mxu0 %v418
        %455 = vmatpush1.msra.mxu0 %v417
        %456 = vmatprep.subr.mxu0 %v420
        %457 = vmatpush1.msra.mxu0 %v419
        %458 = vmatprep.subr.mxu0 %v422
        %459 = vmatpush1.msra.mxu0 %v421
        %460 = vmatprep.subr.mxu0 %v424
        %461 = vmatpush1.msra.mxu0 %v423
        %462 = vmatprep.subr.mxu0 0.0
        %463 = vmatpush1.msra.mxu0 0.0
        %464 = vmatprep.subr.mxu0 0.0
        %465 = vmatpush1.msra.mxu0 0.0
        %466 = vmatprep.subr.mxu0 0.0
        %467 = vmatpush1.msra.mxu0 0.0
        %468 = vmatprep.subr.mxu0 0.0
        %469 = vmatpush1.msra.mxu0 0.0
        %470 = vmatprep.subr.mxu0 0.0
        %471 = vmatpush1.msra.mxu0 0.0
        %472 = vmatprep.subr.mxu0 0.0
        %473 = vmatpush1.msra.mxu0 0.0
        %474 = vmatprep.subr.mxu0 0.0
        %475 = vmatpush1.msra.mxu0 0.0
        %476 = vmatprep.subr.mxu0 0.0
        %477 = vmatpush1.msra.mxu0 0.0
        %478 = vmatprep.subr.mxu0 0.0
        %479 = vmatpush1.msra.mxu0 0.0
        %480 = vmatprep.subr.mxu0 0.0
        %481 = vmatpush1.msra.mxu0 0.0
        %482 = vmatprep.subr.mxu0 0.0
        %483 = vmatpush1.msra.mxu0 0.0
        %484 = vmatprep.subr.mxu0 0.0
        %485 = vmatpush1.msra.mxu0 0.0
        %486 = vmatprep.subr.mxu0 0.0
        %487 = vmatpush1.msra.mxu0 0.0
        %488 = vmatprep.subr.mxu0 0.0
        %489 = vmatpush1.msra.mxu0 0.0
        %490 = vmatprep.subr.mxu0 0.0
        %491 = vmatpush1.msra.mxu0 0.0
        %492 = vmatprep.subr.mxu0 0.0
        %493 = vmatpush1.msra.mxu0 0.0
        %494 = vmatprep.subr.mxu0 0.0
        %495 = vmatpush1.msra.mxu0 0.0
        %496 = vmatprep.subr.mxu0 0.0
        %497 = vmatpush1.msra.mxu0 0.0
        %498 = vmatprep.subr.mxu0 0.0
        %499 = vmatpush1.msra.mxu0 0.0
        %500 = vmatprep.subr.mxu0 0.0
        %501 = vmatpush1.msra.mxu0 0.0
        %502 = vmatprep.subr.mxu0 0.0
        %503 = vmatpush1.msra.mxu0 0.0
        %504 = vmatprep.subr.mxu0 0.0
        %505 = vmatpush1.msra.mxu0 0.0
        %506 = vmatprep.subr.mxu0 0.0
        %507 = vmatpush1.msra.mxu0 0.0
        %508 = vmatprep.mubr.f32.mxu0 0.0
        %509 = vmatmul.mubr.f32.gmra.mrb[0].mxu0 %v439
        %v510 = vpop.f32.mrb[0].mxu0
        %v511 = vadd.f32 %v430, %v510
        %v512 = vpop.f32.mrb[0].mxu0
        %v513 = vadd.f32 %v430, %v512
        %514 = vmatprep.mubr.f32.mxu0 0.0
        %515 = vmatmul.mubr.f32.gmra.mrb[0].mxu0 %v442
        %v516 = vpop.f32.mrb[0].mxu0
        %v517 = vadd.f32 %v435, %v516
        %v518 = vpop.f32.mrb[0].mxu0
        %v519 = vadd.f32 %v435, %v518
        %520 = vdwg.mxu0
        %521 = vst [vmem:[%s178] sm:$0xff] %v511
        %522 = vst [vmem:[%s178 + $0x8] sm:$0xff] %v513
        %523 = vst [vmem:[%s178 + $0x10] sm:$0xff] %v517
        %524 = vst [vmem:[%s178 + $0x18] sm:$0xff] %v519
        %s525 = sand.u32 %s94, 1
        %s526 = scalar_lea.sflag [#allocation6], %s525
        %s527 = sand.u32 %s94, 1
        %s528 = smul.addr %s527, 32
        %s529 = scalar_lea.vmem [#allocation7], %s528
        // Predicated region
        $region37: #{tpu_custom_call.1} parent=31 // pred_check
          %p530 = pneg %p104
        $region38: #{tpu_custom_call.1} parent=31 // pred_check_branch
          %532 = sbr.rel (%p530) target = $region40
        $region39: #{tpu_custom_call.1} parent=31 // pred_region
          %s534 = ssub.s32 512, 512
          %535 = vsyncadd %s526, %s534
          %s536 = smul.addr %s18, 4
          %s537 = smul.addr %s536, 128
          %s538 = scalar_lea.hbm %s3, %s537
          %s539 = sshll.u32 %s529, 4
          %s540 = int_to_ptr.vmem [resolvable:$true] %s539
          %545 = dma.vmem_to_hbm [thread:$0]  %s540, 512, %s538, %s526, 256, 256, 16
        $region40: #{tpu_custom_call.1} parent=31 // pred_fallthru
          _
      $region32: #{tpu_custom_call.1} parent=5 // pred_fallthru
        _
      %p546 = scmp.le.s32.totalorder 2, %s13
      // Predicated region
      $region41: #{tpu_custom_call.1} parent=5 // pred_check
        %p547 = pneg %p546
      $region42: #{tpu_custom_call.1} parent=5 // pred_check_branch
        %549 = sbr.rel (%p547) target = $region44
      $region43: #{tpu_custom_call.1} parent=5 // pred_region
        %s550 = ssub.s32 %s13, 2
        // Predicated region
        $region45: #{tpu_custom_call.1} parent=43 // pred_check
          %p551 = pneg %p110
        $region46: #{tpu_custom_call.1} parent=43 // pred_check_branch
          %553 = sbr.rel (%p551) target = $region48
        $region47: #{tpu_custom_call.1} parent=43 // pred_region
          %s554 = sand.u32 %s95, 1
          %s555 = scalar_lea.sflag [#allocation6], %s554
          %s556 = sand.u32 %s95, 1
          %s557 = smul.addr %s556, 32
          %s558 = scalar_lea.vmem [#allocation7], %s557
          %559 = dma.done %s555, 512
        $region48: #{tpu_custom_call.1} parent=43 // pred_fallthru
          _
      $region44: #{tpu_custom_call.1} parent=5 // pred_fallthru
        _
    $region6: #{tpu_custom_call.1} parent=1 // loop_footer
      %s17 = sadd.s32 1, %s13
    $region7: #{tpu_custom_call.1} parent=1 // loop_footer_branch
      %12 = sbr.rel target = $region3
    $region8: #{tpu_custom_call.1} parent=1 // loop_exit
      _
    %560 = vsyncpa [#allocation5], 1
    %s561 = scalar_lea.sflag [#allocation5], 1
    %562 = vsyncpa %s561, 1
    %563 = vsyncpa [#allocation6], 1
    %s564 = scalar_lea.sflag [#allocation6], 1
    %565 = vsyncpa %s564, 1

</llo_original>
